<compile_context>
chip_gen: v7x
topology: tpu7x:2x2x1
jax: 0.10.0
libtpu: 0.0.40
codegen_flags: <defaults>
</compile_context>

<pallas_src>
import functools

import jax
import jax.numpy as jnp
from jax import lax
from jax.experimental import pallas as pl
from jax.experimental.pallas import tpu as pltpu

MARGIN = 0.5
AVG = True
EPS = 1e-6


def _cosmargin_kernel(x1_ref, x2_ref, y_ref, out_ref, acc_ref, *,
                      margin, inv_batch, n_rows, row_tile, tiles_per_split):
    """One (tn, D) row tile; accumulate per-row losses across the inner
    ('arbitrary') grid axis, finalize on the last tile of each split."""
    s = pl.program_id(0)
    t = pl.program_id(1)

    @pl.when(t == 0)
    def _():
        acc_ref[...] = jnp.zeros_like(acc_ref)

    # Cast per-tile: inputs may be bf16 in HBM, compute in f32 on the VPU.
    x1 = x1_ref[...].astype(jnp.float32)          # (tn, D)
    x2 = x2_ref[...].astype(jnp.float32)          # (tn, D)
    y = y_ref[...]                                # (tn, 1) int32

    # Row-wise cosine similarity along the lane (feature) axis.
    dot = jnp.sum(x1 * x2, axis=1, keepdims=True)      # (tn, 1)
    n1sq = jnp.sum(x1 * x1, axis=1, keepdims=True)     # (tn, 1)
    n2sq = jnp.sum(x2 * x2, axis=1, keepdims=True)     # (tn, 1)
    eps2 = jnp.float32(EPS * EPS)
    # torch.nn.CosineSimilarity clamps each norm separately:
    #   cos = dot / (max(||x1||, eps) * max(||x2||, eps))
    #       = dot * rsqrt(max(n1^2, eps^2) * max(n2^2, eps^2))
    cos = dot * lax.rsqrt(jnp.maximum(n1sq, eps2) * jnp.maximum(n2sq, eps2))

    # Label-dependent transform (disjoint masks).
    cos = jnp.where(y == 1, 1.0 - cos, cos)
    cos = jnp.where(y == -1, jnp.maximum(cos - margin, 0.0), cos)

    # Mask rows past the true batch size: the last block of a split may be a
    # partial boundary block whose out-of-range rows hold unspecified data.
    base = (s * tiles_per_split + t) * row_tile
    rows = base + lax.broadcasted_iota(jnp.int32, cos.shape, 0)
    cos = jnp.where(rows < n_rows, cos, 0.0)

    acc_ref[...] += cos                                  # (tn, 1) running per-row sums

    @pl.when(t == pl.num_programs(1) - 1)
    def _():
        total = jnp.sum(acc_ref[...], axis=0, keepdims=True) * jnp.float32(inv_batch)
        # Write the per-split partial as a full (8, 128) lane-dense tile:
        # value at [0, 0], zeros elsewhere -> unmasked store, trivial wrapper sum.
        r = lax.broadcasted_iota(jnp.int32, (8, 128), 0)
        c = lax.broadcasted_iota(jnp.int32, (8, 128), 1)
        out_ref[...] = jnp.where((r == 0) & (c == 0), total, 0.0)


def _round_up(x, m):
    return (x + m - 1) // m * m


def _default_num_splits():
    # Only v7x has 2 TensorCores per chip; v5e/v6e have a single TC, where a
    # "parallel" leading grid axis is just a serial loop split.
    try:
        kind = jax.devices()[0].device_kind.lower()
    except Exception:
        return 1
    return 2 if "7" in kind else 1


def cosmargin_loss(input1, input2, y, *, margin=MARGIN, avg=AVG,
                   row_tile=None, num_splits=None):
    assert input1.shape == input2.shape, "Input not the same size"
    assert 0.0 <= margin <= 1.0
    n, d = input1.shape
    elem = jnp.dtype(input1.dtype).itemsize

    # --- Row tile: target ~2 MiB per input block (>= 4 MiB of HBM bytes per
    # grid step) so the ~0.35 us fixed per-step overhead stays hidden.
    if row_tile is None:
        tn = (2 * 1024 * 1024) // (d * elem)
        tn = min(tn, 8192)
        # VMEM cap: 2 inputs x 2 pipeline buffers x (tn*d*elem) plus the
        # lane-padded (tn,1) blocks: y (2 buffers) + acc scratch, each tn*128*4 B.
        vmem_budget = 36 * 1024 * 1024
        bytes_per_row = 4 * d * elem + 3 * 128 * 4
        tn = min(tn, vmem_budget // bytes_per_row)
    else:
        tn = row_tile
    tn = max(8, (tn // 8) * 8)
    tn = min(tn, _round_up(n, 8))

    tiles_total = -(-n // tn)          # cdiv

    # --- Cross-TC splits: only when they divide the tile count (no fully
    # out-of-bounds blocks), and only >1 on chips with 2 TensorCores.
    ns = _default_num_splits() if num_splits is None else int(num_splits)
    if ns < 1 or tiles_total % ns != 0:
        ns = 1
    tiles_per_split = tiles_total // ns

    inv_batch = (1.0 / float(n)) if avg else 1.0
    kernel = functools.partial(
        _cosmargin_kernel, margin=float(margin), inv_batch=inv_batch,
        n_rows=n, row_tile=tn, tiles_per_split=tiles_per_split)

    # x1/x2 go in unpadded; only the tiny label vector is reshaped/cast.
    yp = y.reshape(n, 1).astype(jnp.int32)

    row_map = lambda s, t: (s * tiles_per_split + t, 0)

    # VMEM footprint of the pipelined blocks (+ headroom); 48 MiB cap is safe
    # on v7x's 64 MiB per-TC VMEM, and well under v5e/v6e's 128 MiB.
    footprint = 4 * tn * d * elem + 3 * tn * 128 * 4 + 2 * 8 * 128 * 4
    vmem_limit = int(min(48 * 1024 * 1024,
                         max(32 * 1024 * 1024, footprint + 8 * 1024 * 1024)))

    cost = pl.CostEstimate(
        flops=6 * n * d,
        transcendentals=n,
        bytes_accessed=2 * n * d * elem + n * 4 + ns * 8 * 128 * 4,
    )

    partials = pl.pallas_call(
        kernel,
        out_shape=jax.ShapeDtypeStruct((ns * 8, 128), jnp.float32),
        grid_spec=pltpu.PrefetchScalarGridSpec(
            num_scalar_prefetch=0,
            grid=(ns, tiles_per_split),
            in_specs=[
                pl.BlockSpec((tn, d), row_map),   # last dim == full D (pad-free)
                pl.BlockSpec((tn, d), row_map),
                pl.BlockSpec((tn, 1), row_map),
            ],
            out_specs=pl.BlockSpec((8, 128), lambda s, t: (s, 0)),
            scratch_shapes=[pltpu.VMEM((tn, 1), jnp.float32)],
        ),
        compiler_params=pltpu.CompilerParams(
            dimension_semantics=("parallel", "arbitrary"),
            vmem_limit_bytes=vmem_limit,
        ),
        cost_estimate=cost,
    )(input1, input2, yp)

    # Each split tile holds its partial (already scaled by 1/batch if avg) at
    # [0, 0] and zeros elsewhere, so a plain sum recovers the loss.
    return jnp.sum(partials)


def _reference(input1, input2, y, margin=MARGIN, avg=AVG):
    # Pure-JAX reference mirroring the PyTorch forward (per-norm eps clamp,
    # as in torch.nn.CosineSimilarity).
    x1 = input1.astype(jnp.float32)
    x2 = input2.astype(jnp.float32)
    dot = jnp.sum(x1 * x2, axis=1)
    n1 = jnp.maximum(jnp.linalg.norm(x1, axis=1), EPS)
    n2 = jnp.maximum(jnp.linalg.norm(x2, axis=1), EPS)
    cos = dot / (n1 * n2)
    cos = jnp.where(y == 1, 1.0 - cos, cos)
    cos = jnp.where(y == -1, jnp.maximum(cos - margin, 0.0), cos)
    out = jnp.sum(cos)
    if avg:
        out = out / x1.shape[0]
    return out


if __name__ == "__main__":
    key = jax.random.PRNGKey(0)
    k1, k2, k3, k4, k5, k6, k7, k8, k9 = jax.random.split(key, 9)

    # Small shape consistent with the module: batch=8 pairs, hidden=32.
    N, D = 8, 32
    input1 = jax.random.normal(k1, (N, D), dtype=jnp.float32)
    input2 = jax.random.normal(k2, (N, D), dtype=jnp.float32)
    y = jnp.where(jax.random.bernoulli(k3, 0.5, (N,)), 1, -1).astype(jnp.int32)

    loss = cosmargin_loss(input1, input2, y)
    jax.block_until_ready(loss)
    ref = _reference(input1, input2, y)
    assert jnp.allclose(loss, ref, atol=1e-5, rtol=1e-5), (loss, ref)

    # Ragged rows + non-128 feature dim with a forced small tile: exercises the
    # multi-tile grid, the pad-free (tn, D) feature block and the in-kernel
    # row mask on the partial boundary block.
    N2, D2 = 300, 96
    a1 = jax.random.normal(k4, (N2, D2), dtype=jnp.float32)
    a2 = jax.random.normal(k5, (N2, D2), dtype=jnp.float32)
    y2 = jnp.where(jax.random.bernoulli(k6, 0.5, (N2,)), 1, -1).astype(jnp.int32)
    loss2 = cosmargin_loss(a1, a2, y2, row_tile=64)
    jax.block_until_ready(loss2)
    ref2 = _reference(a1, a2, y2)
    assert jnp.allclose(loss2, ref2, atol=1e-4, rtol=1e-4), (loss2, ref2)

    # Forced 2-way split (evenly dividing tile count): exercises the
    # megacore-parallel path; on single-TC chips it is a harmless serial split.
    N3, D3 = 256, 40
    b1 = jax.random.normal(k7, (N3, D3), dtype=jnp.float32)
    b2 = jax.random.normal(k8, (N3, D3), dtype=jnp.float32)
    y3 = jnp.where(jax.random.bernoulli(k9, 0.5, (N3,)), 1, -1).astype(jnp.int32)
    loss3 = cosmargin_loss(b1, b2, y3, row_tile=64, num_splits=2)
    jax.block_until_ready(loss3)
    ref3 = _reference(b1, b2, y3)
    assert jnp.allclose(loss3, ref3, atol=1e-4, rtol=1e-4), (loss3, ref3)

    print("KERNEL_OK")
</pallas_src>

<mosaic_0001>
module attributes {stable_mosaic.version = 11 : i64} {
  func.func @_cosmargin_kernel(%arg0: i32, %arg1: i32, %arg2: memref<8x32xf32, #tpu.memory_space<vmem>>, %arg3: memref<8x32xf32, #tpu.memory_space<vmem>>, %arg4: memref<8x1xi32, #tpu.memory_space<vmem>>, %arg5: memref<8x128xf32, #tpu.memory_space<vmem>>, %arg6: memref<8x1xf32, #tpu.memory_space<vmem>>) attributes {dimension_semantics = [#tpu.dimension_semantics<parallel>, #tpu.dimension_semantics<arbitrary>], iteration_bounds = array<i64: 1, 1>, scalar_prefetch = 0 : i64, scratch_operands = 1 : i64, tpu.core_type = #tpu.core_type<tc>, window_params = [{transform_indices = @transform_0, window_bounds = array<i64: 8, 32>}, {transform_indices = @transform_1, window_bounds = array<i64: 8, 32>}, {transform_indices = @transform_2, window_bounds = array<i64: 8, 1>}, {transform_indices = @transform_3, window_bounds = array<i64: 8, 128>}]} {
    %c0_i32 = arith.constant 0 : i32
    %0 = arith.cmpi eq, %arg1, %c0_i32 : i32
    %1 = arith.extui %0 : i1 to i32
    %c0_i32_0 = arith.constant 0 : i32
    %2 = arith.cmpi ne, %1, %c0_i32_0 : i32
    scf.if %2 {
      %cst_22 = arith.constant 0.000000e+00 : f32
      %50 = vector.broadcast %cst_22 : f32 to vector<8x1xf32>
      %c0_23 = arith.constant 0 : index
      %c0_24 = arith.constant 0 : index
      %51 = vector.load %arg6[%c0_23, %c0_24] : memref<8x1xf32, #tpu.memory_space<vmem>>, vector<8x1xf32>
      tpu.vector_store %arg6[%c0_23, %c0_24], %50 {strides = array<i32>} : memref<8x1xf32, #tpu.memory_space<vmem>>, vector<8x1xf32>,
    } else {
    }
    %c0 = arith.constant 0 : index
    %c0_1 = arith.constant 0 : index
    %3 = vector.load %arg2[%c0, %c0_1] : memref<8x32xf32, #tpu.memory_space<vmem>>, vector<8x32xf32>
    %c0_2 = arith.constant 0 : index
    %c0_3 = arith.constant 0 : index
    %4 = vector.load %arg3[%c0_2, %c0_3] : memref<8x32xf32, #tpu.memory_space<vmem>>, vector<8x32xf32>
    %c0_4 = arith.constant 0 : index
    %c0_5 = arith.constant 0 : index
    %5 = vector.load %arg4[%c0_4, %c0_5] : memref<8x1xi32, #tpu.memory_space<vmem>>, vector<8x1xi32>
    %6 = arith.mulf %3, %4 : vector<8x32xf32>
    %cst = arith.constant dense<0.000000e+00> : vector<8xf32>
    %7 = vector.multi_reduction <add>, %6, %cst [1] : vector<8x32xf32> to vector<8xf32>
    %8 = vector.shape_cast %7 : vector<8xf32> to vector<8x1xf32>
    %9 = arith.mulf %3, %3 : vector<8x32xf32>
    %cst_6 = arith.constant dense<0.000000e+00> : vector<8xf32>
    %10 = vector.multi_reduction <add>, %9, %cst_6 [1] : vector<8x32xf32> to vector<8xf32>
    %11 = vector.shape_cast %10 : vector<8xf32> to vector<8x1xf32>
    %12 = arith.mulf %4, %4 : vector<8x32xf32>
    %cst_7 = arith.constant dense<0.000000e+00> : vector<8xf32>
    %13 = vector.multi_reduction <add>, %12, %cst_7 [1] : vector<8x32xf32> to vector<8xf32>
    %14 = vector.shape_cast %13 : vector<8xf32> to vector<8x1xf32>
    %cst_8 = arith.constant 9.99999996E-13 : f32
    %15 = vector.broadcast %cst_8 : f32 to vector<8x1xf32>
    %16 = arith.maximumf %11, %15 : vector<8x1xf32>
    %cst_9 = arith.constant 9.99999996E-13 : f32
    %17 = vector.broadcast %cst_9 : f32 to vector<8x1xf32>
    %18 = arith.maximumf %14, %17 : vector<8x1xf32>
    %19 = arith.mulf %16, %18 : vector<8x1xf32>
    %20 = math.rsqrt %19 : vector<8x1xf32>
    %21 = arith.mulf %8, %20 : vector<8x1xf32>
    %c1_i32 = arith.constant 1 : i32
    %22 = vector.broadcast %c1_i32 : i32 to vector<8x1xi32>
    %23 = arith.cmpi eq, %5, %22 : vector<8x1xi32>
    %cst_10 = arith.constant 1.000000e+00 : f32
    %24 = vector.broadcast %cst_10 : f32 to vector<8x1xf32>
    %25 = arith.subf %24, %21 : vector<8x1xf32>
    %26 = arith.select %23, %25, %21 : vector<8x1xi1>, vector<8x1xf32>
    %c-1_i32 = arith.constant -1 : i32
    %27 = vector.broadcast %c-1_i32 : i32 to vector<8x1xi32>
    %28 = arith.cmpi eq, %5, %27 : vector<8x1xi32>
    %cst_11 = arith.constant 5.000000e-01 : f32
    %29 = vector.broadcast %cst_11 : f32 to vector<8x1xf32>
    %30 = arith.subf %26, %29 : vector<8x1xf32>
    %cst_12 = arith.constant 0.000000e+00 : f32
    %31 = vector.broadcast %cst_12 : f32 to vector<8x1xf32>
    %32 = arith.maximumf %30, %31 : vector<8x1xf32>
    %33 = arith.select %28, %32, %26 : vector<8x1xi1>, vector<8x1xf32>
    %c1_i32_13 = arith.constant 1 : i32
    %34 = arith.muli %arg0, %c1_i32_13 : i32
    %35 = arith.addi %34, %arg1 : i32
    %c8_i32 = arith.constant 8 : i32
    %36 = arith.muli %35, %c8_i32 : i32
    %37 = tpu.iota {dimensions = array<i32: 0>} : vector<8x1xi32>
    %38 = vector.broadcast %36 : i32 to vector<8x1xi32>
    %39 = arith.addi %38, %37 : vector<8x1xi32>
    %c8_i32_14 = arith.constant 8 : i32
    %40 = vector.broadcast %c8_i32_14 : i32 to vector<8x1xi32>
    %41 = arith.cmpi slt, %39, %40 : vector<8x1xi32>
    %cst_15 = arith.constant 0.000000e+00 : f32
    %42 = vector.broadcast %cst_15 : f32 to vector<8x1xf32>
    %43 = arith.select %41, %33, %42 : vector<8x1xi1>, vector<8x1xf32>
    %c0_16 = arith.constant 0 : index
    %c0_17 = arith.constant 0 : index
    %44 = vector.load %arg6[%c0_16, %c0_17] : memref<8x1xf32, #tpu.memory_space<vmem>>, vector<8x1xf32>
    %45 = arith.addf %44, %43 : vector<8x1xf32>
    %c0_18 = arith.constant 0 : index
    %c0_19 = arith.constant 0 : index
    %46 = vector.load %arg6[%c0_18, %c0_19] : memref<8x1xf32, #tpu.memory_space<vmem>>, vector<8x1xf32>
    tpu.vector_store %arg6[%c0_18, %c0_19], %45 {strides = array<i32>} : memref<8x1xf32, #tpu.memory_space<vmem>>, vector<8x1xf32>,
    %c0_i32_20 = arith.constant 0 : i32
    %47 = arith.cmpi eq, %arg1, %c0_i32_20 : i32
    %48 = arith.extui %47 : i1 to i32
    %c0_i32_21 = arith.constant 0 : i32
    %49 = arith.cmpi ne, %48, %c0_i32_21 : i32
    scf.if %49 {
      %c0_22 = arith.constant 0 : index
      %c0_23 = arith.constant 0 : index
      %50 = vector.load %arg6[%c0_22, %c0_23] : memref<8x1xf32, #tpu.memory_space<vmem>>, vector<8x1xf32>
      %cst_24 = arith.constant dense<0.000000e+00> : vector<1xf32>
      %51 = vector.multi_reduction <add>, %50, %cst_24 [0] : vector<8x1xf32> to vector<1xf32>
      %52 = vector.shape_cast %51 : vector<1xf32> to vector<1x1xf32>
      %cst_25 = arith.constant 1.250000e-01 : f32
      %53 = vector.broadcast %cst_25 : f32 to vector<1x1xf32>
      %54 = arith.mulf %52, %53 : vector<1x1xf32>
      %55 = tpu.iota {dimensions = array<i32: 0>} : vector<8x128xi32>
      %56 = tpu.iota {dimensions = array<i32: 1>} : vector<8x128xi32>
      %c0_i32_26 = arith.constant 0 : i32
      %57 = vector.broadcast %c0_i32_26 : i32 to vector<8x128xi32>
      %58 = arith.cmpi eq, %55, %57 : vector<8x128xi32>
      %c0_i32_27 = arith.constant 0 : i32
      %59 = vector.broadcast %c0_i32_27 : i32 to vector<8x128xi32>
      %60 = arith.cmpi eq, %56, %59 : vector<8x128xi32>
      %61 = arith.andi %58, %60 : vector<8x128xi1>
      %cst_28 = arith.constant 0.000000e+00 : f32
      %62 = vector.shape_cast %54 : vector<1x1xf32> to vector<1x1xf32>
      %63 = vector.broadcast %62 : vector<1x1xf32> to vector<8x128xf32>
      %64 = vector.broadcast %cst_28 : f32 to vector<8x128xf32>
      %65 = arith.select %61, %63, %64 : vector<8x128xi1>, vector<8x128xf32>
      %c0_29 = arith.constant 0 : index
      %c0_30 = arith.constant 0 : index
      %66 = vector.load %arg5[%c0_29, %c0_30] : memref<8x128xf32, #tpu.memory_space<vmem>>, vector<8x128xf32>
      tpu.vector_store %arg5[%c0_29, %c0_30], %65 {strides = array<i32>} : memref<8x128xf32, #tpu.memory_space<vmem>>, vector<8x128xf32>,
    } else {
    }
    return
  }
  func.func @transform_0(%arg0: i32, %arg1: i32) -> (i32, i32) {
    %c1_i32 = arith.constant 1 : i32
    %0 = arith.muli %arg0, %c1_i32 : i32
    %1 = arith.addi %0, %arg1 : i32
    %c0_i32 = arith.constant 0 : i32
    %c0_i32_0 = arith.constant 0 : i32
    return %1, %c0_i32 : i32, i32
  }
  func.func @transform_1(%arg0: i32, %arg1: i32) -> (i32, i32) {
    %c1_i32 = arith.constant 1 : i32
    %0 = arith.muli %arg0, %c1_i32 : i32
    %1 = arith.addi %0, %arg1 : i32
    %c0_i32 = arith.constant 0 : i32
    %c0_i32_0 = arith.constant 0 : i32
    return %1, %c0_i32 : i32, i32
  }
  func.func @transform_2(%arg0: i32, %arg1: i32) -> (i32, i32) {
    %c1_i32 = arith.constant 1 : i32
    %0 = arith.muli %arg0, %c1_i32 : i32
    %1 = arith.addi %0, %arg1 : i32
    %c0_i32 = arith.constant 0 : i32
    %c0_i32_0 = arith.constant 0 : i32
    return %1, %c0_i32 : i32, i32
  }
  func.func @transform_3(%arg0: i32, %arg1: i32) -> (i32, i32) {
    %c0_i32 = arith.constant 0 : i32
    %c0_i32_0 = arith.constant 0 : i32
    return %arg0, %c0_i32 : i32, i32
  }
}

</mosaic_0001>

<llo_original>
// kernel: tpu_custom_call.1
$region0: #{tpu_custom_call.1}
  #allocation0 [shape = 'u32[]', space=smem, size = 0x4, offset = 0x4, fixed_abs, tag = 'smem constant byte address 0x4 - core index']
  #allocation1 [shape = 'u32[144,128]{1,0:T(1,128)}', space=vmem, size = 0x12000, scoped, tag = 'internal scratch']
  #allocation2 [shape = 'f32[8,1]{1,0:T(8,128)}', space=vmem, size = 0x1000, scoped, tag = 'scratch operand']
  %s0 = inlined_call_operand.vmem [shape: f32[8,32], index: 0, kind: input, shape index: {}]
  %s1 = inlined_call_operand.hbm [shape: f32[8,32], index: 1, kind: input, shape index: {}]
  %s2 = inlined_call_operand.vmem [shape: s32[8,1], index: 2, kind: input, shape index: {}]
  %s3 = inlined_call_operand.hbm [shape: f32[8,128], index: 3, kind: output, shape index: {}]
  %s4 = sld [smem:[#allocation0]]
  $region34: #{tpu_custom_call.1} parent=0
    _
  %s6 = ssub.s32 1, %s4
  %s7 = scalar_select 0, %s6, %s4
  $region1: #{tpu_custom_call.1} parent=0
    #allocation3 [shape = 'u8[4096]{0}', space=vmem, size = 0x1000, scoped, tag = 'input window, operand 1, single buffered']
    #allocation4 [shape = 's32[1]{0}', space=sflag, size = 0x4, scoped, tag = 'scoped memory for tpu_custom_call.1']
    #allocation5 [shape = 's32[1]{0}', space=sflag, size = 0x4, scoped, tag = 'scoped memory for tpu_custom_call.1']
    #allocation6 [shape = 'u8[4096]{0}', space=vmem, size = 0x1000, scoped, tag = 'output window, operand 0, single buffered']
    %8 = vsyncpa [#allocation4], 0
    %9 = vsyncpa [#allocation5], 0
    // Predicated region
    $region2: #{tpu_custom_call.1} parent=1 // pred_check
      _
    $region3: #{tpu_custom_call.1} parent=1 // pred_check_branch
      %11 = sbr.rel (0) target = $region5
    $region4: #{tpu_custom_call.1} parent=1 // pred_region
      %s12 = sadd.s32 0, 0
      %p13 = scmp.lt.s32.totalorder %s12, 0
      %s14 = scalar_select %p13, %s12, 0
      %s15 = smul.addr %s14, 8
      %s16 = scalar_lea.vmem %s0, %s15
      %s17 = sadd.s32 0, 0
    $region5: #{tpu_custom_call.1} parent=1 // pred_fallthru
      _
    // Predicated region
    $region6: #{tpu_custom_call.1} parent=1 // pred_check
      _
    $region7: #{tpu_custom_call.1} parent=1 // pred_check_branch
      %19 = sbr.rel (0) target = $region9
    $region8: #{tpu_custom_call.1} parent=1 // pred_region
      %s20 = sadd.s32 0, 0
      %s22 = ssub.s32 128, 128
      %23 = vsyncadd [#allocation4], %s22
      %s24 = smul.addr %s20, 128
      %s25 = scalar_lea.hbm %s1, %s24
      %s27 = sshll.u32 [#allocation3], 4
      %s28 = int_to_ptr.vmem [resolvable:$true] %s27
      %30 = dma.hbm_to_vmem [thread:$0]  %s25, 128, %s28, [#allocation4]
    $region9: #{tpu_custom_call.1} parent=1 // pred_fallthru
      _
    // Predicated region
    $region10: #{tpu_custom_call.1} parent=1 // pred_check
      _
    $region11: #{tpu_custom_call.1} parent=1 // pred_check_branch
      %32 = sbr.rel (0) target = $region13
    $region12: #{tpu_custom_call.1} parent=1 // pred_region
      %s33 = sadd.s32 0, 0
      %p34 = scmp.lt.s32.totalorder %s33, 0
      %s35 = scalar_select %p34, %s33, 0
      %s36 = smul.addr %s35, 8
      %s37 = scalar_lea.vmem %s2, %s36
      %s38 = sadd.s32 0, 0
    $region13: #{tpu_custom_call.1} parent=1 // pred_fallthru
      _
    // Predicated region
    $region14: #{tpu_custom_call.1} parent=1 // pred_check
      _
    $region15: #{tpu_custom_call.1} parent=1 // pred_check_branch
      %40 = sbr.rel (0) target = $region17
    $region16: #{tpu_custom_call.1} parent=1 // pred_region
      %41 = dma.done [#allocation4], 128
    $region17: #{tpu_custom_call.1} parent=1 // pred_fallthru
      _
    %s42 = sadd.s32 0, 0
    %p43 = scmp.lt.s32.totalorder %s42, 0
    %s44 = scalar_select %p43, %s42, 0
    %s45 = smul.addr %s44, 8
    %s46 = scalar_lea.vmem %s0, %s45
    %s47 = sadd.s32 0, 0
    %p48 = scmp.lt.s32.totalorder %s47, 0
    %s49 = scalar_select %p48, %s47, 0
    %s50 = smul.addr %s49, 8
    %s51 = scalar_lea.vmem %s2, %s50
    %s52 = sadd.s32 0, 0
    %p53 = scmp.lt.s32.totalorder %s52, 0
    %s54 = scalar_select %p53, %s52, 0
    %s55 = smul.addr %s54, 8
    %s56 = scalar_lea.vmem %s0, %s55
    %s57 = sadd.s32 0, 0
    %s58 = sadd.s32 0, 0
    %s59 = sadd.s32 0, 0
    %p60 = scmp.lt.s32.totalorder %s59, 0
    %s61 = scalar_select %p60, %s59, 0
    %s62 = smul.addr %s61, 8
    %s63 = scalar_lea.vmem %s2, %s62
    %s64 = sadd.s32 0, 0
    %p65 = scmp.eq.s32.totalorder 0, 0
    // Predicated region
    $region18: #{tpu_custom_call.1} parent=1 // pred_check
      %p66 = pneg %p65
    $region19: #{tpu_custom_call.1} parent=1 // pred_check_branch
      %68 = sbr.rel (%p66) target = $region21
    $region20: #{tpu_custom_call.1} parent=1 // pred_region
      %vm69 = vcmask 7168
      %70 = vst.msk [vmem:[#allocation2] sm:$0xff] %vm69, 0.0
    $region21: #{tpu_custom_call.1} parent=1 // pred_fallthru
      _
    %v71 = vld [vmem:[%s56] sm:$0xff]
    %v72 = vld [vmem:[#allocation3] sm:$0xff]
    %v73 = vld [vmem:[%s63] sm:$0xff]
    %v74 = vmul.f32 %v71, %v72
    %vm75 = vcmask 261120
    %v76 = vsel %vm75, %v74, 0.0
    %77 = vadd.xlane.f32.xlu0 %v76
    %v78 = vpop.xlane.xlu0 %77
    %v79 = vmul.f32 %v71, %v71
    %v80 = vsel %vm75, %v79, 0.0
    %81 = vadd.xlane.f32.xlu0 %v80
    %v82 = vpop.xlane.xlu0 %81
    %v83 = vmul.f32 %v72, %v72
    %v84 = vsel %vm75, %v83, 0.0
    %85 = vadd.xlane.f32.xlu0 %v84
    %v86 = vpop.xlane.xlu0 %85
    %v87 = vmax.f32 %v82, 1e-12
    %v88 = vmax.f32 %v86, 1e-12
    %v89 = vmul.f32 %v87, %v88
    %v90 = vrsqrt.pop %v89
    %v91 = vmul.f32 %v78, %v90
    %vm92 = vcmp.eq.s32.totalorder %v73, 1
    %v93 = vsub.f32 1.0, %v91
    %v94 = vsel %vm92, %v93, %v91
    %vm95 = vcmp.eq.s32.totalorder %v73, 4294967295
    %v96 = vsub.f32 %v94, 0.5
    %v97 = vmax.f32 %v96, 0.0
    %v98 = vsel %vm95, %v97, %v94
    %s99 = sadd.s32 0, 0
    %s100 = smul.u32 %s99, 8
    %v101 = vlaneseq
    %v102 = vshrl.u32 %v101, 7
    %v103 = vstv %s100
    %v104 = vadd.s32 %v103, %v102
    %vm105 = vcmp.lt.s32.totalorder %v104, 8
    %v106 = vsel %vm105, %v98, 0.0
    %v107 = vld [vmem:[#allocation2] sm:$0xff]
    %v108 = vadd.f32 %v107, %v106
    %vm109 = vcmask 7168
    %110 = vst.msk [vmem:[#allocation2] sm:$0xff] %vm109, %v108
    // Predicated region
    $region22: #{tpu_custom_call.1} parent=1 // pred_check
      %p111 = pneg %p65
    $region23: #{tpu_custom_call.1} parent=1 // pred_check_branch
      %113 = sbr.rel (%p111) target = $region25
    $region24: #{tpu_custom_call.1} parent=1 // pred_region
      %v114 = vld [vmem:[#allocation2] sm:$0xff]
      %v115 = vsel %vm109, %v114, 0.0
      %v116 = vrot.slane %v115, 4
      %v117 = vadd.f32 %v115, %v116
      %v118 = vrot.slane %v117, 2
      %v119 = vadd.f32 %v117, %v118
      %v120 = vrot.slane %v119, 1
      %v121 = vadd.f32 %v119, %v120
      %v122 = vmul.f32 %v121, 0.125
      %v123 = vlaneseq
      %v124 = vand.u32 %v123, 127
      %vm125 = vcmp.eq.s32.totalorder %v102, 0
      %vm126 = vcmp.eq.s32.totalorder %v124, 0
      %vm127 = vmand %vm125, %vm126
      %129 = vset.pattern.permute.xlu0 0
      %130 = vperm.xlu0 %129, %v122
      %v131 = vpop.permute.xlu0 %130
      %v133 = vsel %vm127, %v131, 0.0
      %134 = vst [vmem:[#allocation6] sm:$0xff] %v133
    $region25: #{tpu_custom_call.1} parent=1 // pred_fallthru
      _
    // Predicated region
    $region26: #{tpu_custom_call.1} parent=1 // pred_check
      _
    $region27: #{tpu_custom_call.1} parent=1 // pred_check_branch
      %136 = sbr.rel (0) target = $region29
    $region28: #{tpu_custom_call.1} parent=1 // pred_region
      %s138 = ssub.s32 128, 128
      %139 = vsyncadd [#allocation5], %s138
      %s141 = sshll.u32 [#allocation6], 4
      %s142 = int_to_ptr.vmem [resolvable:$true] %s141
      %144 = dma.vmem_to_hbm [thread:$0]  %s142, 128, %s3, [#allocation5]
    $region29: #{tpu_custom_call.1} parent=1 // pred_fallthru
      _
    // Predicated region
    $region30: #{tpu_custom_call.1} parent=1 // pred_check
      _
    $region31: #{tpu_custom_call.1} parent=1 // pred_check_branch
      %146 = sbr.rel (0) target = $region33
    $region32: #{tpu_custom_call.1} parent=1 // pred_region
      %147 = dma.done [#allocation5], 128
    $region33: #{tpu_custom_call.1} parent=1 // pred_fallthru
      _
    %148 = vsyncpa [#allocation4], 1
    %149 = vsyncpa [#allocation5], 1

</llo_original>
